<compile_context>
chip_gen: v5e
topology: v5e:2x2
jax: 0.10.0
libtpu: 0.0.40
codegen_flags: <defaults>
</compile_context>

<pallas_src>
import jax
import jax.numpy as jnp
from jax.experimental import pallas as pl
from jax.experimental.pallas import tpu as pltpu

SMOOTH = 0.0001
LANES = 128
SUBLANES = 8
MAX_TILE_S = 2048  # 2048 sublanes * 128 lanes * 4 B = 1 MiB per f32 input block


def _dice_kernel(x_ref, t_ref, dice_ref, num_acc, den_acc):
    """Streaming per-sample dice.

    x_ref, t_ref : (1, TILE_S, 128) VMEM tiles of sample i (grid axis 0)
    dice_ref     : (1, 1, 128) per-sample dice, broadcast over lanes
    num_acc/den_acc : (1, 128) f32 lane-partial accumulators (scratch)
    """
    k = pl.program_id(1)

    @pl.when(k == 0)
    def _init():
        num_acc[...] = jnp.zeros_like(num_acc)
        den_acc[...] = jnp.zeros_like(den_acc)

    x = x_ref[...].astype(jnp.float32)
    t = t_ref[...].astype(jnp.float32)

    # One sublane-reduce each per tile; keep lane partials so the cross-lane
    # reduce only happens once, in the epilogue.  (x_sum + t_sum) is fused.
    num_acc[...] += jnp.sum(x * t, axis=1)   # (1, 128)
    den_acc[...] += jnp.sum(x + t, axis=1)   # (1, 128)

    @pl.when(k == pl.num_programs(1) - 1)
    def _finalize():
        inter = jnp.sum(num_acc[...], axis=1, keepdims=True)   # (1, 1)
        denom = jnp.sum(den_acc[...], axis=1, keepdims=True)   # (1, 1)
        dice = (2.0 * inter + SMOOTH) / (denom + SMOOTH)        # (1, 1)
        dice_ref[...] = jnp.broadcast_to(
            dice.reshape(1, 1, 1), dice_ref.shape
        ).astype(dice_ref.dtype)


def _round_up(v, m):
    return -(-v // m) * m


def dice_loss(inp, target):
    """Pallas implementation of DiceLoss.forward.

    inp, target: arrays with leading batch dim N (e.g. NCHW).  Trailing dims
    are flattened per sample, matching `view(N, -1)` in PyTorch.
    Returns a float32 scalar.
    """
    n = inp.shape[0]
    x = inp.reshape(n, -1)
    t = target.reshape(n, -1)
    d = x.shape[1]

    # Lane/sublane-dense per-sample layout: (N, S_pad, 128), S_pad multiple of 8.
    s = _round_up(-(-d // LANES), SUBLANES)
    num_tiles = max(1, -(-s // MAX_TILE_S))
    tile_s = _round_up(-(-s // num_tiles), SUBLANES)
    s_pad = num_tiles * tile_s
    d_pad = s_pad * LANES

    if d_pad != d:
        # Zero padding is neutral for all three row sums.
        x = jnp.pad(x, ((0, 0), (0, d_pad - d)))
        t = jnp.pad(t, ((0, 0), (0, d_pad - d)))
    x3 = x.reshape(n, s_pad, LANES)
    t3 = t.reshape(n, s_pad, LANES)

    in_bytes = x3.dtype.itemsize + t3.dtype.itemsize
    block_bytes = tile_s * LANES * 4  # f32 worst case per input block
    cost = pl.CostEstimate(
        flops=4 * n * d_pad,
        transcendentals=0,
        bytes_accessed=n * d_pad * in_bytes + n * LANES * 4,
    )

    dice = pl.pallas_call(
        _dice_kernel,
        out_shape=jax.ShapeDtypeStruct((n, 1, LANES), jnp.float32),
        grid_spec=pltpu.PrefetchScalarGridSpec(
            num_scalar_prefetch=0,
            grid=(n, num_tiles),
            in_specs=[
                pl.BlockSpec((1, tile_s, LANES), lambda i, k: (i, k, 0)),
                pl.BlockSpec((1, tile_s, LANES), lambda i, k: (i, k, 0)),
            ],
            out_specs=pl.BlockSpec((1, 1, LANES), lambda i, k: (i, 0, 0)),
            scratch_shapes=[
                pltpu.VMEM((1, LANES), jnp.float32),
                pltpu.VMEM((1, LANES), jnp.float32),
            ],
        ),
        compiler_params=pltpu.CompilerParams(
            dimension_semantics=("parallel", "arbitrary"),
            vmem_limit_bytes=int(max(8 * block_bytes, 32 * 1024 * 1024)),
        ),
        cost_estimate=cost,
    )(x3, t3)

    # Tiny batch-mean epilogue in plain JAX (keeps the batch grid axis parallel).
    return 1.0 - jnp.sum(dice[:, 0, 0]) / n


def dice_loss_ref(inp, target):
    # pure-JAX reference mirroring the PyTorch module
    n = inp.shape[0]
    x = inp.reshape(n, -1).astype(jnp.float32)
    t = target.reshape(n, -1).astype(jnp.float32)
    inter = jnp.sum(x * t, axis=1)
    dice = (2.0 * inter + SMOOTH) / (jnp.sum(x, axis=1) + jnp.sum(t, axis=1) + SMOOTH)
    return 1.0 - jnp.sum(dice) / n


if __name__ == "__main__":
    key = jax.random.PRNGKey(0)
    k1, k2 = jax.random.split(key)

    N, C, H, W = 2, 4, 16, 16
    # "probability-like" predictions and binary targets, as DiceLoss expects
    x = jax.nn.sigmoid(jax.random.normal(k1, (N, C, H, W), dtype=jnp.float32))
    tgt = (jax.random.uniform(k2, (N, C, H, W)) > 0.5).astype(jnp.float32)

    loss = dice_loss(x, tgt)
    jax.block_until_ready(loss)

    ref = dice_loss_ref(x, tgt)
    assert jnp.allclose(loss, ref, atol=1e-5, rtol=1e-5), (loss, ref)

    print("KERNEL_OK")
</pallas_src>

<mosaic_0001>
module attributes {stable_mosaic.version = 11 : i64} {
  func.func @_dice_kernel(%arg0: i32, %arg1: i32, %arg2: memref<1x8x128xf32, #tpu.memory_space<vmem>>, %arg3: memref<1x8x128xf32, #tpu.memory_space<vmem>>, %arg4: memref<1x1x128xf32, #tpu.memory_space<vmem>>, %arg5: memref<1x128xf32, #tpu.memory_space<vmem>>, %arg6: memref<1x128xf32, #tpu.memory_space<vmem>>) attributes {dimension_semantics = [#tpu.dimension_semantics<parallel>, #tpu.dimension_semantics<arbitrary>], iteration_bounds = array<i64: 2, 1>, scalar_prefetch = 0 : i64, scratch_operands = 2 : i64, tpu.core_type = #tpu.core_type<tc>, window_params = [{transform_indices = @transform_0, window_bounds = array<i64: 1, 8, 128>}, {transform_indices = @transform_1, window_bounds = array<i64: 1, 8, 128>}, {transform_indices = @transform_2, window_bounds = array<i64: 1, 1, 128>}]} {
    %c0_i32 = arith.constant 0 : i32
    %0 = arith.cmpi eq, %arg1, %c0_i32 : i32
    %1 = arith.extui %0 : i1 to i32
    %c0_i32_0 = arith.constant 0 : i32
    %2 = arith.cmpi ne, %1, %c0_i32_0 : i32
    scf.if %2 {
      %cst_17 = arith.constant 0.000000e+00 : f32
      %18 = vector.broadcast %cst_17 : f32 to vector<1x128xf32>
      %c0_18 = arith.constant 0 : index
      %c0_19 = arith.constant 0 : index
      %19 = vector.load %arg5[%c0_18, %c0_19] : memref<1x128xf32, #tpu.memory_space<vmem>>, vector<1x128xf32>
      tpu.vector_store %arg5[%c0_18, %c0_19], %18 {strides = array<i32>} : memref<1x128xf32, #tpu.memory_space<vmem>>, vector<1x128xf32>,
      %cst_20 = arith.constant 0.000000e+00 : f32
      %20 = vector.broadcast %cst_20 : f32 to vector<1x128xf32>
      %c0_21 = arith.constant 0 : index
      %c0_22 = arith.constant 0 : index
      %21 = vector.load %arg6[%c0_21, %c0_22] : memref<1x128xf32, #tpu.memory_space<vmem>>, vector<1x128xf32>
      tpu.vector_store %arg6[%c0_21, %c0_22], %20 {strides = array<i32>} : memref<1x128xf32, #tpu.memory_space<vmem>>, vector<1x128xf32>,
    } else {
    }
    %c0 = arith.constant 0 : index
    %c0_1 = arith.constant 0 : index
    %c0_2 = arith.constant 0 : index
    %3 = vector.load %arg2[%c0, %c0_1, %c0_2] : memref<1x8x128xf32, #tpu.memory_space<vmem>>, vector<1x8x128xf32>
    %c0_3 = arith.constant 0 : index
    %c0_4 = arith.constant 0 : index
    %c0_5 = arith.constant 0 : index
    %4 = vector.load %arg3[%c0_3, %c0_4, %c0_5] : memref<1x8x128xf32, #tpu.memory_space<vmem>>, vector<1x8x128xf32>
    %c0_6 = arith.constant 0 : index
    %c0_7 = arith.constant 0 : index
    %5 = vector.load %arg5[%c0_6, %c0_7] : memref<1x128xf32, #tpu.memory_space<vmem>>, vector<1x128xf32>
    %6 = arith.mulf %3, %4 : vector<1x8x128xf32>
    %cst = arith.constant dense<0.000000e+00> : vector<1x128xf32>
    %7 = vector.multi_reduction <add>, %6, %cst [1] : vector<1x8x128xf32> to vector<1x128xf32>
    %8 = arith.addf %5, %7 : vector<1x128xf32>
    %c0_8 = arith.constant 0 : index
    %c0_9 = arith.constant 0 : index
    %9 = vector.load %arg5[%c0_8, %c0_9] : memref<1x128xf32, #tpu.memory_space<vmem>>, vector<1x128xf32>
    tpu.vector_store %arg5[%c0_8, %c0_9], %8 {strides = array<i32>} : memref<1x128xf32, #tpu.memory_space<vmem>>, vector<1x128xf32>,
    %c0_10 = arith.constant 0 : index
    %c0_11 = arith.constant 0 : index
    %10 = vector.load %arg6[%c0_10, %c0_11] : memref<1x128xf32, #tpu.memory_space<vmem>>, vector<1x128xf32>
    %11 = arith.addf %3, %4 : vector<1x8x128xf32>
    %cst_12 = arith.constant dense<0.000000e+00> : vector<1x128xf32>
    %12 = vector.multi_reduction <add>, %11, %cst_12 [1] : vector<1x8x128xf32> to vector<1x128xf32>
    %13 = arith.addf %10, %12 : vector<1x128xf32>
    %c0_13 = arith.constant 0 : index
    %c0_14 = arith.constant 0 : index
    %14 = vector.load %arg6[%c0_13, %c0_14] : memref<1x128xf32, #tpu.memory_space<vmem>>, vector<1x128xf32>
    tpu.vector_store %arg6[%c0_13, %c0_14], %13 {strides = array<i32>} : memref<1x128xf32, #tpu.memory_space<vmem>>, vector<1x128xf32>,
    %c0_i32_15 = arith.constant 0 : i32
    %15 = arith.cmpi eq, %arg1, %c0_i32_15 : i32
    %16 = arith.extui %15 : i1 to i32
    %c0_i32_16 = arith.constant 0 : i32
    %17 = arith.cmpi ne, %16, %c0_i32_16 : i32
    scf.if %17 {
      %c0_17 = arith.constant 0 : index
      %c0_18 = arith.constant 0 : index
      %18 = vector.load %arg5[%c0_17, %c0_18] : memref<1x128xf32, #tpu.memory_space<vmem>>, vector<1x128xf32>
      %cst_19 = arith.constant dense<0.000000e+00> : vector<1xf32>
      %19 = vector.multi_reduction <add>, %18, %cst_19 [1] : vector<1x128xf32> to vector<1xf32>
      %20 = vector.shape_cast %19 : vector<1xf32> to vector<1x1xf32>
      %c0_20 = arith.constant 0 : index
      %c0_21 = arith.constant 0 : index
      %21 = vector.load %arg6[%c0_20, %c0_21] : memref<1x128xf32, #tpu.memory_space<vmem>>, vector<1x128xf32>
      %cst_22 = arith.constant dense<0.000000e+00> : vector<1xf32>
      %22 = vector.multi_reduction <add>, %21, %cst_22 [1] : vector<1x128xf32> to vector<1xf32>
      %23 = vector.shape_cast %22 : vector<1xf32> to vector<1x1xf32>
      %cst_23 = arith.constant 2.000000e+00 : f32
      %24 = vector.broadcast %cst_23 : f32 to vector<1x1xf32>
      %25 = arith.mulf %24, %20 : vector<1x1xf32>
      %cst_24 = arith.constant 9.99999974E-5 : f32
      %26 = vector.broadcast %cst_24 : f32 to vector<1x1xf32>
      %27 = arith.addf %25, %26 : vector<1x1xf32>
      %cst_25 = arith.constant 9.99999974E-5 : f32
      %28 = vector.broadcast %cst_25 : f32 to vector<1x1xf32>
      %29 = arith.addf %23, %28 : vector<1x1xf32>
      %30 = arith.divf %27, %29 : vector<1x1xf32>
      %31 = vector.shape_cast %30 : vector<1x1xf32> to vector<1x1x1xf32>
      %32 = vector.shape_cast %31 : vector<1x1x1xf32> to vector<1x1x1xf32>
      %33 = vector.broadcast %32 : vector<1x1x1xf32> to vector<1x1x128xf32>
      %c0_26 = arith.constant 0 : index
      %c0_27 = arith.constant 0 : index
      %c0_28 = arith.constant 0 : index
      %34 = vector.load %arg4[%c0_26, %c0_27, %c0_28] : memref<1x1x128xf32, #tpu.memory_space<vmem>>, vector<1x1x128xf32>
      tpu.vector_store %arg4[%c0_26, %c0_27, %c0_28], %33 {strides = array<i32>} : memref<1x1x128xf32, #tpu.memory_space<vmem>>, vector<1x1x128xf32>,
    } else {
    }
    return
  }
  func.func @transform_0(%arg0: i32, %arg1: i32) -> (i32, i32, i32) {
    %c0_i32 = arith.constant 0 : i32
    %c0_i32_0 = arith.constant 0 : i32
    return %arg0, %arg1, %c0_i32 : i32, i32, i32
  }
  func.func @transform_1(%arg0: i32, %arg1: i32) -> (i32, i32, i32) {
    %c0_i32 = arith.constant 0 : i32
    %c0_i32_0 = arith.constant 0 : i32
    return %arg0, %arg1, %c0_i32 : i32, i32, i32
  }
  func.func @transform_2(%arg0: i32, %arg1: i32) -> (i32, i32, i32) {
    %c0_i32 = arith.constant 0 : i32
    %c0_i32_0 = arith.constant 0 : i32
    %c0_i32_1 = arith.constant 0 : i32
    return %arg0, %c0_i32, %c0_i32_0 : i32, i32, i32
  }
}

</mosaic_0001>

<llo_original>
// kernel: tpu_custom_call.1
$region0: #{tpu_custom_call.1}
  #allocation0 [shape = 'u32[]', space=smem, size = 0x4, offset = 0x4, fixed_abs, tag = 'smem constant byte address 0x4 - core index']
  #allocation1 [shape = 'u32[72,128]{1,0:T(1,128)}', space=vmem, size = 0x9000, scoped, tag = 'internal scratch']
  #allocation2 [shape = 'f32[1,128]{1,0:T(1,128)}', space=vmem, size = 0x200, scoped, tag = 'scratch operand']
  #allocation3 [shape = 'f32[1,128]{1,0:T(1,128)}', space=vmem, size = 0x200, scoped, tag = 'scratch operand']
  %s0 = inlined_call_operand.hbm [shape: f32[2,8,128], index: 0, kind: input, shape index: {}]
  %s1 = inlined_call_operand.hbm [shape: f32[2,8,128], index: 1, kind: input, shape index: {}]
  %s2 = inlined_call_operand.hbm [shape: f32[2,1,128], index: 2, kind: output, shape index: {}]
  %s3 = sld [smem:[#allocation0]]
  $region57: #{tpu_custom_call.1} parent=0
    _
  %s5 = ssub.s32 1, %s3
  %s6 = scalar_select 0, %s5, %s3
  $region1: #{tpu_custom_call.1} parent=0
    #allocation4 [shape = 'u8[8192]{0}', space=vmem, size = 0x2000, scoped, tag = 'input window, operand 0']
    #allocation5 [shape = 's32[2]{0}', space=sflag, size = 0x8, scoped, tag = 'scoped memory for tpu_custom_call.1']
    #allocation6 [shape = 's32[2]{0}', space=sflag, size = 0x8, scoped, tag = 'scoped memory for tpu_custom_call.1']
    #allocation7 [shape = 'u8[8192]{0}', space=vmem, size = 0x2000, scoped, tag = 'input window, operand 1']
    #allocation8 [shape = 's32[2]{0}', space=sflag, size = 0x8, scoped, tag = 'scoped memory for tpu_custom_call.1']
    #allocation9 [shape = 'u8[1024]{0}', space=vmem, size = 0x400, scoped, tag = 'output window, operand 0']
    %7 = vsyncpa [#allocation5], 0
    %s8 = scalar_lea.sflag [#allocation5], 1
    %9 = vsyncpa %s8, 0
    %10 = vsyncpa [#allocation8], 0
    %s11 = scalar_lea.sflag [#allocation8], 1
    %12 = vsyncpa %s11, 0
    %13 = vsyncpa [#allocation6], 0
    %s14 = scalar_lea.sflag [#allocation6], 1
    %15 = vsyncpa %s14, 0
    loop: start=0, step=1, limit=4
    $region2: #{tpu_custom_call.1} parent=1 // loop_pre_header
      _
    $region3: #{tpu_custom_call.1} parent=1 // loop_header
      %s17 = sphi 0, %s21
      %p18 = scmp.ge.s32.totalorder %s17, 4
      %s24 = sphi 0, %s36
      %s25 = sphi 0, %s32
      %s26 = sphi 0, %s24
      %s27 = sphi 0, %s25
      %s28 = sphi 0, %s26
      %s29 = sphi 0, %s27
      %s41 = sphi 0, %s43
      %s44 = sphi 0, %s41
      %s45 = sphi 0, %s44
      %s61 = sphi 0, %s45
      %s69 = sphi 0, %s71
      %s72 = sphi 0, %s69
      %s73 = sphi 0, %s72
      %s89 = sphi 0, %s73
      %s95 = sphi 0, %s97
      %s98 = sphi 0, %s95
      %s99 = sphi 0, %s98
      %s115 = sphi 0, %s99
    $region4: #{tpu_custom_call.1} parent=1 // loop_header_branch
      %20 = sbr.rel (%p18) target = $region8
    $region5: #{tpu_custom_call.1} parent=1 // loop_body
      %s22 = ssub.s32 %s17, 1
      %s23 = ssub.s32 %s17, 2
      %s30 = sadd.s32 1, %s25
      %p31 = scmp.ge.s32.totalorder %s30, 1
      %s32 = scalar_select %p31, 0, %s30
      %s33 = sadd.s32 1, %s24
      %s34 = scalar_select %p31, %s33, %s24
      %p35 = scmp.ge.s32.totalorder %s34, 2
      %s36 = scalar_select %p35, 0, %s34
      %s37 = ssub.s32 %s24, %s36
      %s38 = ssub.s32 %s25, %s32
      %s39 = sor.u32 %s37, %s38
      %p40 = scmp.eq.s32.totalorder %s39, 0
      %s42 = sadd.s32 %s41, 1
      %s43 = scalar_select %p40, %s41, %s42
      %p46 = pneg %p40
      %p47 = scmp.eq.s32.totalorder %s17, 1
      %p48 = por %p46, %p47
      %p49 = scmp.ne.s32.totalorder %s41, %s44
      %p50 = scmp.eq.s32.totalorder %s17, 0
      %p51 = por %p49, %p50
      %p52 = scmp.ne.s32.totalorder %s41, %s44
      %p53 = scmp.eq.s32.totalorder %s22, 1
      %p54 = por %p52, %p53
      %p55 = scmp.ne.s32.totalorder %s44, %s45
      %p56 = scmp.eq.s32.totalorder %s22, 0
      %p57 = por %p55, %p56
      %p58 = scmp.ne.s32.totalorder %s44, %s45
      %p59 = scmp.eq.s32.totalorder %s23, 1
      %p60 = por %p58, %p59
      %p62 = scmp.ne.s32.totalorder %s45, %s61
      %p63 = scmp.eq.s32.totalorder %s23, 0
      %p64 = por %p62, %p63
      %s65 = ssub.s32 %s24, %s36
      %s66 = ssub.s32 %s25, %s32
      %s67 = sor.u32 %s65, %s66
      %p68 = scmp.eq.s32.totalorder %s67, 0
      %s70 = sadd.s32 %s69, 1
      %s71 = scalar_select %p68, %s69, %s70
      %p74 = pneg %p68
      %p75 = scmp.eq.s32.totalorder %s17, 1
      %p76 = por %p74, %p75
      %p77 = scmp.ne.s32.totalorder %s69, %s72
      %p78 = scmp.eq.s32.totalorder %s17, 0
      %p79 = por %p77, %p78
      %p80 = scmp.ne.s32.totalorder %s69, %s72
      %p81 = scmp.eq.s32.totalorder %s22, 1
      %p82 = por %p80, %p81
      %p83 = scmp.ne.s32.totalorder %s72, %s73
      %p84 = scmp.eq.s32.totalorder %s22, 0
      %p85 = por %p83, %p84
      %p86 = scmp.ne.s32.totalorder %s72, %s73
      %p87 = scmp.eq.s32.totalorder %s23, 1
      %p88 = por %p86, %p87
      %p90 = scmp.ne.s32.totalorder %s73, %s89
      %p91 = scmp.eq.s32.totalorder %s23, 0
      %p92 = por %p90, %p91
      %s93 = ssub.s32 %s24, %s36
      %p94 = scmp.eq.s32.totalorder %s93, 0
      %s96 = sadd.s32 %s95, 1
      %s97 = scalar_select %p94, %s95, %s96
      %p100 = pneg %p94
      %p101 = scmp.eq.s32.totalorder %s17, 1
      %p102 = por %p100, %p101
      %p103 = scmp.ne.s32.totalorder %s95, %s98
      %p104 = scmp.eq.s32.totalorder %s17, 0
      %p105 = por %p103, %p104
      %p106 = scmp.ne.s32.totalorder %s95, %s98
      %p107 = scmp.eq.s32.totalorder %s22, 1
      %p108 = por %p106, %p107
      %p109 = scmp.ne.s32.totalorder %s98, %s99
      %p110 = scmp.eq.s32.totalorder %s22, 0
      %p111 = por %p109, %p110
      %p112 = scmp.ne.s32.totalorder %s98, %s99
      %p113 = scmp.eq.s32.totalorder %s23, 1
      %p114 = por %p112, %p113
      %p116 = scmp.ne.s32.totalorder %s99, %s115
      %p117 = scmp.eq.s32.totalorder %s23, 0
      %p118 = por %p116, %p117
      %p119 = scmp.le.s32.totalorder 1, %s17
      %p120 = scmp.lt.s32.totalorder %s17, 3
      %p121 = pnand %p119, %p120
      %p122 = pneg %p121
      // Predicated region
      $region9: #{tpu_custom_call.1} parent=5 // pred_check
        _
      $region10: #{tpu_custom_call.1} parent=5 // pred_check_branch
        %124 = sbr.rel (%p121) target = $region12
      $region11: #{tpu_custom_call.1} parent=5 // pred_region
        %s125 = ssub.s32 %s17, 1
      $region12: #{tpu_custom_call.1} parent=5 // pred_fallthru
        _
      %p126 = scmp.lt.s32.totalorder %s17, 2
      // Predicated region
      $region13: #{tpu_custom_call.1} parent=5 // pred_check
        %p127 = pneg %p126
      $region14: #{tpu_custom_call.1} parent=5 // pred_check_branch
        %129 = sbr.rel (%p127) target = $region16
      $region15: #{tpu_custom_call.1} parent=5 // pred_region
        // Predicated region
        $region17: #{tpu_custom_call.1} parent=15 // pred_check
          %p130 = pneg %p51
        $region18: #{tpu_custom_call.1} parent=15 // pred_check_branch
          %132 = sbr.rel (%p130) target = $region20
        $region19: #{tpu_custom_call.1} parent=15 // pred_region
          %s133 = sand.u32 %s41, 1
          %s134 = scalar_lea.sflag [#allocation5], %s133
          %s135 = sand.u32 %s41, 1
          %s136 = smul.addr %s135, 8
          %s137 = scalar_lea.vmem [#allocation4], %s136
          %139 = vsyncadd %s134, 0
          %s140 = sadd.s32 %s25, %s24
          %s141 = smul.addr %s140, 8
          %s142 = scalar_lea.hbm %s0, %s141
          %s144 = sshll.u32 %s142, 4
          %s145 = int_to_ptr.hbm [resolvable:$true] %s144
          %s146 = sshll.u32 %s137, 4
          %s147 = int_to_ptr.vmem [resolvable:$true] %s146
          %149 = dma.hbm_to_vmem [thread:$0]  %s145, 128, %s147, %s134
        $region20: #{tpu_custom_call.1} parent=15 // pred_fallthru
          _
        // Predicated region
        $region21: #{tpu_custom_call.1} parent=15 // pred_check
          %p150 = pneg %p79
        $region22: #{tpu_custom_call.1} parent=15 // pred_check_branch
          %152 = sbr.rel (%p150) target = $region24
        $region23: #{tpu_custom_call.1} parent=15 // pred_region
          %s153 = sand.u32 %s69, 1
          %s154 = scalar_lea.sflag [#allocation8], %s153
          %s155 = sand.u32 %s69, 1
          %s156 = smul.addr %s155, 8
          %s157 = scalar_lea.vmem [#allocation7], %s156
          %159 = vsyncadd %s154, 0
          %s160 = sadd.s32 %s25, %s24
          %s161 = smul.addr %s160, 8
          %s162 = scalar_lea.hbm %s1, %s161
          %s164 = sshll.u32 %s162, 4
          %s165 = int_to_ptr.hbm [resolvable:$true] %s164
          %s166 = sshll.u32 %s157, 4
          %s167 = int_to_ptr.vmem [resolvable:$true] %s166
          %169 = dma.hbm_to_vmem [thread:$0]  %s165, 128, %s167, %s154
        $region24: #{tpu_custom_call.1} parent=15 // pred_fallthru
          _
      $region16: #{tpu_custom_call.1} parent=5 // pred_fallthru
        _
      %p170 = scmp.le.s32.totalorder 1, %s17
      %p171 = scmp.lt.s32.totalorder %s17, 3
      %p172 = pnand %p170, %p171
      %p173 = pneg %p172
      // Predicated region
      $region25: #{tpu_custom_call.1} parent=5 // pred_check
        _
      $region26: #{tpu_custom_call.1} parent=5 // pred_check_branch
        %175 = sbr.rel (%p172) target = $region28
      $region27: #{tpu_custom_call.1} parent=5 // pred_region
        %s176 = ssub.s32 %s17, 1
        %s177 = sand.u32 %s44, 1
        %s178 = scalar_lea.sflag [#allocation5], %s177
        %s179 = sand.u32 %s44, 1
        %s180 = smul.addr %s179, 8
        %s181 = scalar_lea.vmem [#allocation4], %s180
        // Predicated region
        $region29: #{tpu_custom_call.1} parent=27 // pred_check
          %p182 = pneg %p57
        $region30: #{tpu_custom_call.1} parent=27 // pred_check_branch
          %184 = sbr.rel (%p182) target = $region32
        $region31: #{tpu_custom_call.1} parent=27 // pred_region
          %186 = dma.done %s178, 128
        $region32: #{tpu_custom_call.1} parent=27 // pred_fallthru
          _
        %s187 = sand.u32 %s72, 1
        %s188 = scalar_lea.sflag [#allocation8], %s187
        %s189 = sand.u32 %s72, 1
        %s190 = smul.addr %s189, 8
        %s191 = scalar_lea.vmem [#allocation7], %s190
        // Predicated region
        $region33: #{tpu_custom_call.1} parent=27 // pred_check
          %p192 = pneg %p85
        $region34: #{tpu_custom_call.1} parent=27 // pred_check_branch
          %194 = sbr.rel (%p192) target = $region36
        $region35: #{tpu_custom_call.1} parent=27 // pred_region
          %196 = dma.done %s188, 128
        $region36: #{tpu_custom_call.1} parent=27 // pred_fallthru
          _
        %s197 = sand.u32 %s44, 1
        %s198 = scalar_lea.sflag [#allocation5], %s197
        %s199 = sand.u32 %s44, 1
        %s200 = smul.addr %s199, 8
        %s201 = scalar_lea.vmem [#allocation4], %s200
        %p202 = pneg %p57
        %p203 = pneg %p54
        %s204 = sand.u32 %s72, 1
        %s205 = scalar_lea.sflag [#allocation8], %s204
        %s206 = sand.u32 %s72, 1
        %s207 = smul.addr %s206, 8
        %s208 = scalar_lea.vmem [#allocation7], %s207
        %p209 = pneg %p85
        %p210 = pneg %p82
        %p211 = pneg %p111
        %p212 = pneg %p108
        %s213 = sand.u32 %s98, 1
        %s214 = scalar_lea.sflag [#allocation6], %s213
        %s215 = sand.u32 %s98, 1
        %s216 = scalar_lea.vmem [#allocation9], %s215
        %p217 = scmp.eq.s32.totalorder %s27, 0
        // Predicated region
        $region37: #{tpu_custom_call.1} parent=27 // pred_check
          %p218 = pneg %p217
        $region38: #{tpu_custom_call.1} parent=27 // pred_check_branch
          %220 = sbr.rel (%p218) target = $region40
        $region39: #{tpu_custom_call.1} parent=27 // pred_region
          %221 = vst [vmem:[#allocation2] sm:$0x1] 0.0
          %222 = vst [vmem:[#allocation3] sm:$0x1] 0.0
        $region40: #{tpu_custom_call.1} parent=27 // pred_fallthru
          _
        %v223 = vld [vmem:[%s181] sm:$0xff]
        %v224 = vld [vmem:[%s191] sm:$0xff]
        %v225 = vld [vmem:[#allocation2] sm:$0x1]
        %v226 = vmul.f32 %v223, %v224
        %v227 = vrot.slane %v226, 4
        %v228 = vadd.f32 %v226, %v227
        %v229 = vrot.slane %v228, 2
        %v230 = vadd.f32 %v228, %v229
        %v231 = vrot.slane %v230, 1
        %v232 = vadd.f32 %v230, %v231
        %v233 = vadd.f32 %v225, %v232
        %234 = vst [vmem:[#allocation2] sm:$0x1] %v233
        %v235 = vld [vmem:[#allocation3] sm:$0x1]
        %v236 = vadd.f32 %v223, %v224
        %v237 = vrot.slane %v236, 4
        %v238 = vadd.f32 %v236, %v237
        %v239 = vrot.slane %v238, 2
        %v240 = vadd.f32 %v238, %v239
        %v241 = vrot.slane %v240, 1
        %v242 = vadd.f32 %v240, %v241
        %v243 = vadd.f32 %v235, %v242
        %244 = vst [vmem:[#allocation3] sm:$0x1] %v243
        // Predicated region
        $region41: #{tpu_custom_call.1} parent=27 // pred_check
          %p245 = pneg %p217
        $region42: #{tpu_custom_call.1} parent=27 // pred_check_branch
          %247 = sbr.rel (%p245) target = $region44
        $region43: #{tpu_custom_call.1} parent=27 // pred_region
          %v248 = vld [vmem:[#allocation2] sm:$0x1]
          %vm249 = vcmask 1040384
          %v250 = vsel %vm249, %v248, 0.0
          %251 = vadd.xlane.f32.xlu0 %v250
          %v252 = vpop.xlane.xlu0 %251
          %v253 = vld [vmem:[#allocation3] sm:$0x1]
          %v254 = vsel %vm249, %v253, 0.0
          %255 = vadd.xlane.f32.xlu0 %v254
          %v256 = vpop.xlane.xlu0 %255
          %v257 = vmul.f32 %v252, 2.0
          %v258 = vadd.f32 %v257, 0.0001
          %v259 = vadd.f32 %v256, 0.0001
          %v260 = vrcp.pop %v259
          %v261 = vmul.f32 %v259, %v260
          %v262 = vsub.f32 1.0, %v261
          %v263 = vmul.f32 %v260, %v262
          %v264 = vadd.f32 %v260, %v263
          %vm265 = vweird.f32 %v259
          %vm266 = vweird.f32 %v260
          %vm267 = vmor %vm265, %vm266
          %v268 = vsel %vm267, %v260, %v264
          %v269 = vand.u32 2147483647, %v259
          %vm270 = vcmp.eq.f32.partialorder %v269, 8.507059e+37
          %v271 = vand.u32 %v259, 2147483648
          %v272 = vor.u32 1.1754944e-38, %v271
          %v273 = vsel %vm270, %v272, %v268
          %v274 = vmul.f32 %v258, %v273
          %275 = vst [vmem:[%s216] sm:$0x1] %v274
        $region44: #{tpu_custom_call.1} parent=27 // pred_fallthru
          _
        %s276 = sand.u32 %s98, 1
        %s277 = scalar_lea.sflag [#allocation6], %s276
        %s278 = sand.u32 %s98, 1
        %s279 = scalar_lea.vmem [#allocation9], %s278
        // Predicated region
        $region45: #{tpu_custom_call.1} parent=27 // pred_check
          %p280 = pneg %p108
        $region46: #{tpu_custom_call.1} parent=27 // pred_check_branch
          %282 = sbr.rel (%p280) target = $region48
        $region47: #{tpu_custom_call.1} parent=27 // pred_region
          %284 = vsyncadd %s277, 0
          %s285 = scalar_lea.hbm %s2, %s26
          %s287 = sshll.u32 %s279, 4
          %s288 = int_to_ptr.vmem [resolvable:$true] %s287
          %s289 = sshll.u32 %s285, 4
          %s290 = int_to_ptr.hbm [resolvable:$true] %s289
          %292 = dma.vmem_to_hbm [thread:$0]  %s288, 16, %s290, %s277
        $region48: #{tpu_custom_call.1} parent=27 // pred_fallthru
          _
      $region28: #{tpu_custom_call.1} parent=5 // pred_fallthru
        _
      %p293 = scmp.le.s32.totalorder 2, %s17
      // Predicated region
      $region49: #{tpu_custom_call.1} parent=5 // pred_check
        %p294 = pneg %p293
      $region50: #{tpu_custom_call.1} parent=5 // pred_check_branch
        %296 = sbr.rel (%p294) target = $region52
      $region51: #{tpu_custom_call.1} parent=5 // pred_region
        %s297 = ssub.s32 %s17, 2
        // Predicated region
        $region53: #{tpu_custom_call.1} parent=51 // pred_check
          %p298 = pneg %p114
        $region54: #{tpu_custom_call.1} parent=51 // pred_check_branch
          %300 = sbr.rel (%p298) target = $region56
        $region55: #{tpu_custom_call.1} parent=51 // pred_region
          %s301 = sand.u32 %s99, 1
          %s302 = scalar_lea.sflag [#allocation6], %s301
          %s303 = sand.u32 %s99, 1
          %s304 = scalar_lea.vmem [#allocation9], %s303
          %306 = dma.done %s302, 16
        $region56: #{tpu_custom_call.1} parent=51 // pred_fallthru
          _
      $region52: #{tpu_custom_call.1} parent=5 // pred_fallthru
        _
    $region6: #{tpu_custom_call.1} parent=1 // loop_footer
      %s21 = sadd.s32 1, %s17
    $region7: #{tpu_custom_call.1} parent=1 // loop_footer_branch
      %16 = sbr.rel target = $region3
    $region8: #{tpu_custom_call.1} parent=1 // loop_exit
      _
    %307 = vsyncpa [#allocation5], 1
    %s308 = scalar_lea.sflag [#allocation5], 1
    %309 = vsyncpa %s308, 1
    %310 = vsyncpa [#allocation8], 1
    %s311 = scalar_lea.sflag [#allocation8], 1
    %312 = vsyncpa %s311, 1
    %313 = vsyncpa [#allocation6], 1
    %s314 = scalar_lea.sflag [#allocation6], 1
    %315 = vsyncpa %s314, 1

</llo_original>
